<compile_context>
chip_gen: v6e
topology: v6e:2x2x1
jax: 0.10.0
libtpu: 0.0.40
codegen_flags: <defaults>
</compile_context>

<pallas_src>
import functools

import jax
import jax.numpy as jnp
from jax.experimental import pallas as pl
from jax.experimental.pallas import tpu as pltpu

EMBED_DIM = 32
HIDDEN_LAYERS = (64, 32, 16, 8)
OUTPUT_RANGE = (1, 5)
NORM_MIN = float(min(OUTPUT_RANGE))
NORM_RANGE = float(abs(OUTPUT_RANGE[1] - OUTPUT_RANGE[0]) + 1)


def _round_up(x, m):
    return (x + m - 1) // m * m


def ncf_mlp_kernel(xu_ref, xi_ref, w1u_ref, w1i_ref, b1_ref,
                   w2_ref, b2_ref, w3_ref, b3_ref, w4_ref, b4_ref, o_ref):
    # Activations are [features, TB]; batch lives on the lane axis.
    xu = xu_ref[...].astype(jnp.float32)                         # (32, TB)
    xi = xi_ref[...].astype(jnp.float32)                         # (32, TB)

    # Layer 1 (64 -> 32): concat fused as two matmuls into one accumulator.
    h = (jnp.dot(w1u_ref[...], xu, preferred_element_type=jnp.float32)
         + jnp.dot(w1i_ref[...], xi, preferred_element_type=jnp.float32)
         + b1_ref[...])
    h = jnp.maximum(h, 0.0)                                      # (32, TB)

    # Layer 2 (32 -> 16) and Layer 3 (16 -> 8).
    h = jnp.dot(w2_ref[...], h, preferred_element_type=jnp.float32) + b2_ref[...]
    h = jnp.maximum(h, 0.0)                                      # (16, TB)
    h = jnp.dot(w3_ref[...], h, preferred_element_type=jnp.float32) + b3_ref[...]
    h = jnp.maximum(h, 0.0)                                      # (8, TB)

    # Layer 4 (8 -> 1): VPU multiply + sublane (XLU) reduce, no N=1 matmul.
    z = jnp.sum(h * w4_ref[...], axis=0, keepdims=True) + b4_ref[...]   # (1, TB)

    o_ref[...] = jax.nn.sigmoid(z) * NORM_RANGE + NORM_MIN       # lane-dense store


@functools.partial(jax.jit, static_argnames=("tb", "emb_dtype"))
def ncf_forward(user_indices, item_indices, params, *, tb=512,
                emb_dtype=jnp.bfloat16):
    # Embedding gathers (cheap glue, fused by XLA with the transpose/cast/pad).
    emb_u = jnp.take(params["embedding_user"], user_indices, axis=0)   # (B, E)
    emb_i = jnp.take(params["embedding_item"], item_indices, axis=0)   # (B, E)
    B, E = emb_u.shape

    # Tile size: multiple of 128 (lane width; also covers bf16 sublane packing),
    # clamped for tiny batches; pad batch so no partial tile is dropped.
    tb = max(128, min(int(tb), _round_up(B, 128)))
    tb = _round_up(tb, 128)
    Bp = _round_up(B, tb)
    ntiles = Bp // tb
    pad = Bp - B

    xu_t = jnp.pad(emb_u, ((0, pad), (0, 0))).T.astype(emb_dtype)      # (E, Bp)
    xi_t = jnp.pad(emb_i, ((0, pad), (0, 0))).T.astype(emb_dtype)      # (E, Bp)

    # Transposed weights (tiny; x @ W + b  ==  W^T @ x^T + b^T).
    w1 = params["w1"]                          # (2E, H1)
    w1u_t = w1[:E, :].T                        # (H1, E)
    w1i_t = w1[E:, :].T                        # (H1, E)
    b1_t = params["b1"].reshape(-1, 1)         # (H1, 1)
    w2_t = params["w2"].T                      # (H2, H1)
    b2_t = params["b2"].reshape(-1, 1)         # (H2, 1)
    w3_t = params["w3"].T                      # (H3, H2)
    b3_t = params["b3"].reshape(-1, 1)         # (H3, 1)
    w4 = params["w4"]                          # (H3, 1) -> broadcast column
    b4 = params["b4"].reshape(1, 1)            # (1, 1)

    def full(arr):
        return pl.BlockSpec(arr.shape, lambda i: (0, 0))

    out_t = pl.pallas_call(
        ncf_mlp_kernel,
        out_shape=jax.ShapeDtypeStruct((1, Bp), jnp.float32),
        grid_spec=pltpu.PrefetchScalarGridSpec(
            num_scalar_prefetch=0,
            grid=(ntiles,),
            in_specs=[
                pl.BlockSpec((E, tb), lambda i: (0, i)),   # user embeddings^T
                pl.BlockSpec((E, tb), lambda i: (0, i)),   # item embeddings^T
                full(w1u_t), full(w1i_t), full(b1_t),
                full(w2_t), full(b2_t),
                full(w3_t), full(b3_t),
                full(w4), full(b4),
            ],
            out_specs=pl.BlockSpec((1, tb), lambda i: (0, i)),
        ),
        compiler_params=pltpu.CompilerParams(
            dimension_semantics=("parallel",)),
    )(xu_t, xi_t, w1u_t, w1i_t, b1_t, w2_t, b2_t, w3_t, b3_t, w4, b4)

    return out_t[0, :B].reshape(B, 1)


def xavier_uniform(key, fan_in, fan_out):
    limit = (6.0 / (fan_in + fan_out)) ** 0.5
    return jax.random.uniform(key, (fan_in, fan_out), jnp.float32, -limit, limit)


def init_params(key, num_users, num_films, embed_dim=EMBED_DIM,
                hidden_layers=HIDDEN_LAYERS):
    keys = jax.random.split(key, 6)
    params = {
        "embedding_user": jax.random.uniform(
            keys[0], (num_users, embed_dim), jnp.float32, -0.05, 0.05),
        "embedding_item": jax.random.uniform(
            keys[1], (num_films, embed_dim), jnp.float32, -0.05, 0.05),
    }
    # MLP: Linear(64->32) ReLU, Linear(32->16) ReLU, Linear(16->8) ReLU,
    #      Linear(8->1) Sigmoid.  Weights stored [in, out]; kernel transposes.
    dims = list(hidden_layers) + [1]
    for li in range(len(dims) - 1):
        fan_in, fan_out = dims[li], dims[li + 1]
        params[f"w{li+1}"] = xavier_uniform(keys[2 + li], fan_in, fan_out)
        params[f"b{li+1}"] = jnp.zeros((1, fan_out), jnp.float32)
    return params


def ncf_reference(user_indices, item_indices, params):
    # Pure-JAX f32 reference for correctness checking.
    x = jnp.concatenate([params["embedding_user"][user_indices],
                         params["embedding_item"][item_indices]], axis=-1)
    for li in range(1, 4):
        x = jnp.maximum(x @ params[f"w{li}"] + params[f"b{li}"], 0.0)
    x = jax.nn.sigmoid(x @ params["w4"] + params["b4"])
    return x * NORM_RANGE + NORM_MIN


if __name__ == "__main__":
    key = jax.random.PRNGKey(0)
    num_users, num_films, batch = 64, 100, 8

    pkey, ukey, ikey = jax.random.split(key, 3)
    params = init_params(pkey, num_users, num_films)
    user_indices = jax.random.randint(ukey, (batch,), 0, num_users)
    item_indices = jax.random.randint(ikey, (batch,), 0, num_films)

    # 1) Default (bf16 embedding stream) path.
    out = ncf_forward(user_indices, item_indices, params)
    out = jax.block_until_ready(out)
    ref = ncf_reference(user_indices, item_indices, params)
    assert out.shape == (batch, 1)
    assert jnp.allclose(out, ref, atol=2e-2, rtol=0), (out, ref)

    # 2) f32 path, tight tolerance.
    out_f32 = jax.block_until_ready(
        ncf_forward(user_indices, item_indices, params, emb_dtype=jnp.float32))
    assert jnp.allclose(out_f32, ref, atol=1e-5, rtol=1e-5), (out_f32, ref)

    # 3) Multi-tile grid with batch padding (B=300, tb=128 -> 3 tiles, 84 pad).
    b2 = 300
    u2 = jax.random.randint(jax.random.PRNGKey(1), (b2,), 0, num_users)
    i2 = jax.random.randint(jax.random.PRNGKey(2), (b2,), 0, num_films)
    out2 = jax.block_until_ready(ncf_forward(u2, i2, params, tb=128))
    ref2 = ncf_reference(u2, i2, params)
    assert out2.shape == (b2, 1)
    assert jnp.allclose(out2, ref2, atol=2e-2, rtol=0)

    print("KERNEL_OK")
</pallas_src>

<mosaic_0001>
module attributes {stable_mosaic.version = 11 : i64} {
  func.func @ncf_mlp_kernel(%arg0: i32, %arg1: memref<32x128xbf16, #tpu.memory_space<vmem>>, %arg2: memref<32x128xbf16, #tpu.memory_space<vmem>>, %arg3: memref<32x32xf32, #tpu.memory_space<vmem>>, %arg4: memref<32x32xf32, #tpu.memory_space<vmem>>, %arg5: memref<32x1xf32, #tpu.memory_space<vmem>>, %arg6: memref<16x32xf32, #tpu.memory_space<vmem>>, %arg7: memref<16x1xf32, #tpu.memory_space<vmem>>, %arg8: memref<8x16xf32, #tpu.memory_space<vmem>>, %arg9: memref<8x1xf32, #tpu.memory_space<vmem>>, %arg10: memref<8x1xf32, #tpu.memory_space<vmem>>, %arg11: memref<1x1xf32, #tpu.memory_space<vmem>>, %arg12: memref<1x128xf32, #tpu.memory_space<vmem>>) attributes {dimension_semantics = [#tpu.dimension_semantics<parallel>], iteration_bounds = array<i64: 1>, scalar_prefetch = 0 : i64, scratch_operands = 0 : i64, tpu.core_type = #tpu.core_type<tc>, window_params = [{transform_indices = @transform_0, window_bounds = array<i64: 32, 128>}, {transform_indices = @transform_1, window_bounds = array<i64: 32, 128>}, {pipeline_mode = #tpu.pipeline_mode<synchronous>, transform_indices = @transform_2, window_bounds = array<i64: 32, 32>}, {pipeline_mode = #tpu.pipeline_mode<synchronous>, transform_indices = @transform_3, window_bounds = array<i64: 32, 32>}, {pipeline_mode = #tpu.pipeline_mode<synchronous>, transform_indices = @transform_4, window_bounds = array<i64: 32, 1>}, {pipeline_mode = #tpu.pipeline_mode<synchronous>, transform_indices = @transform_5, window_bounds = array<i64: 16, 32>}, {pipeline_mode = #tpu.pipeline_mode<synchronous>, transform_indices = @transform_6, window_bounds = array<i64: 16, 1>}, {pipeline_mode = #tpu.pipeline_mode<synchronous>, transform_indices = @transform_7, window_bounds = array<i64: 8, 16>}, {pipeline_mode = #tpu.pipeline_mode<synchronous>, transform_indices = @transform_8, window_bounds = array<i64: 8, 1>}, {pipeline_mode = #tpu.pipeline_mode<synchronous>, transform_indices = @transform_9, window_bounds = array<i64: 8, 1>}, {pipeline_mode = #tpu.pipeline_mode<synchronous>, transform_indices = @transform_10, window_bounds = array<i64: 1, 1>}, {transform_indices = @transform_11, window_bounds = array<i64: 1, 128>}]} {
    %c0 = arith.constant 0 : index
    %c0_0 = arith.constant 0 : index
    %0 = vector.load %arg1[%c0, %c0_0] : memref<32x128xbf16, #tpu.memory_space<vmem>>, vector<32x128xbf16>
    %1 = arith.extf %0 : vector<32x128xbf16> to vector<32x128xf32>
    %c0_1 = arith.constant 0 : index
    %c0_2 = arith.constant 0 : index
    %2 = vector.load %arg2[%c0_1, %c0_2] : memref<32x128xbf16, #tpu.memory_space<vmem>>, vector<32x128xbf16>
    %3 = arith.extf %2 : vector<32x128xbf16> to vector<32x128xf32>
    %c0_3 = arith.constant 0 : index
    %c0_4 = arith.constant 0 : index
    %4 = vector.load %arg3[%c0_3, %c0_4] : memref<32x32xf32, #tpu.memory_space<vmem>>, vector<32x32xf32>
    %cst = arith.constant dense<0.000000e+00> : vector<32x128xf32>
    %5 = tpu.matmul %4, %1, %cst {dimension_numbers = #tpu.dot_dimension_numbers<[1], [0], [0], [1], [0, 0, 1, 1], [], []>} : vector<32x32xf32>, vector<32x128xf32>, vector<32x128xf32> -> vector<32x128xf32>
    %c0_5 = arith.constant 0 : index
    %c0_6 = arith.constant 0 : index
    %6 = vector.load %arg4[%c0_5, %c0_6] : memref<32x32xf32, #tpu.memory_space<vmem>>, vector<32x32xf32>
    %cst_7 = arith.constant dense<0.000000e+00> : vector<32x128xf32>
    %7 = tpu.matmul %6, %3, %cst_7 {dimension_numbers = #tpu.dot_dimension_numbers<[1], [0], [0], [1], [0, 0, 1, 1], [], []>} : vector<32x32xf32>, vector<32x128xf32>, vector<32x128xf32> -> vector<32x128xf32>
    %8 = arith.addf %5, %7 : vector<32x128xf32>
    %c0_8 = arith.constant 0 : index
    %c0_9 = arith.constant 0 : index
    %9 = vector.load %arg5[%c0_8, %c0_9] : memref<32x1xf32, #tpu.memory_space<vmem>>, vector<32x1xf32>
    %10 = vector.broadcast %9 : vector<32x1xf32> to vector<32x128xf32>
    %11 = arith.addf %8, %10 : vector<32x128xf32>
    %cst_10 = arith.constant 0.000000e+00 : f32
    %12 = vector.broadcast %cst_10 : f32 to vector<32x128xf32>
    %13 = arith.maximumf %11, %12 : vector<32x128xf32>
    %c0_11 = arith.constant 0 : index
    %c0_12 = arith.constant 0 : index
    %14 = vector.load %arg6[%c0_11, %c0_12] : memref<16x32xf32, #tpu.memory_space<vmem>>, vector<16x32xf32>
    %cst_13 = arith.constant dense<0.000000e+00> : vector<16x128xf32>
    %15 = tpu.matmul %14, %13, %cst_13 {dimension_numbers = #tpu.dot_dimension_numbers<[1], [0], [0], [1], [0, 0, 1, 1], [], []>} : vector<16x32xf32>, vector<32x128xf32>, vector<16x128xf32> -> vector<16x128xf32>
    %c0_14 = arith.constant 0 : index
    %c0_15 = arith.constant 0 : index
    %16 = vector.load %arg7[%c0_14, %c0_15] : memref<16x1xf32, #tpu.memory_space<vmem>>, vector<16x1xf32>
    %17 = vector.broadcast %16 : vector<16x1xf32> to vector<16x128xf32>
    %18 = arith.addf %15, %17 : vector<16x128xf32>
    %cst_16 = arith.constant 0.000000e+00 : f32
    %19 = vector.broadcast %cst_16 : f32 to vector<16x128xf32>
    %20 = arith.maximumf %18, %19 : vector<16x128xf32>
    %c0_17 = arith.constant 0 : index
    %c0_18 = arith.constant 0 : index
    %21 = vector.load %arg8[%c0_17, %c0_18] : memref<8x16xf32, #tpu.memory_space<vmem>>, vector<8x16xf32>
    %cst_19 = arith.constant dense<0.000000e+00> : vector<8x128xf32>
    %22 = tpu.matmul %21, %20, %cst_19 {dimension_numbers = #tpu.dot_dimension_numbers<[1], [0], [0], [1], [0, 0, 1, 1], [], []>} : vector<8x16xf32>, vector<16x128xf32>, vector<8x128xf32> -> vector<8x128xf32>
    %c0_20 = arith.constant 0 : index
    %c0_21 = arith.constant 0 : index
    %23 = vector.load %arg9[%c0_20, %c0_21] : memref<8x1xf32, #tpu.memory_space<vmem>>, vector<8x1xf32>
    %24 = vector.broadcast %23 : vector<8x1xf32> to vector<8x128xf32>
    %25 = arith.addf %22, %24 : vector<8x128xf32>
    %cst_22 = arith.constant 0.000000e+00 : f32
    %26 = vector.broadcast %cst_22 : f32 to vector<8x128xf32>
    %27 = arith.maximumf %25, %26 : vector<8x128xf32>
    %c0_23 = arith.constant 0 : index
    %c0_24 = arith.constant 0 : index
    %28 = vector.load %arg10[%c0_23, %c0_24] : memref<8x1xf32, #tpu.memory_space<vmem>>, vector<8x1xf32>
    %29 = vector.broadcast %28 : vector<8x1xf32> to vector<8x128xf32>
    %30 = arith.mulf %27, %29 : vector<8x128xf32>
    %cst_25 = arith.constant dense<0.000000e+00> : vector<128xf32>
    %31 = vector.multi_reduction <add>, %30, %cst_25 [0] : vector<8x128xf32> to vector<128xf32>
    %32 = vector.shape_cast %31 : vector<128xf32> to vector<1x128xf32>
    %c0_26 = arith.constant 0 : index
    %c0_27 = arith.constant 0 : index
    %33 = vector.load %arg11[%c0_26, %c0_27] : memref<1x1xf32, #tpu.memory_space<vmem>>, vector<1x1xf32>
    %34 = vector.broadcast %33 : vector<1x1xf32> to vector<1x128xf32>
    %35 = arith.addf %32, %34 : vector<1x128xf32>
    %36 = arith.negf %35 : vector<1x128xf32>
    %37 = math.exp %36 : vector<1x128xf32>
    %cst_28 = arith.constant 1.000000e+00 : f32
    %38 = vector.broadcast %cst_28 : f32 to vector<1x128xf32>
    %39 = arith.addf %38, %37 : vector<1x128xf32>
    %40 = arith.divf %38, %39 : vector<1x128xf32>
    %cst_29 = arith.constant 5.000000e+00 : f32
    %41 = vector.broadcast %cst_29 : f32 to vector<1x128xf32>
    %42 = arith.mulf %40, %41 : vector<1x128xf32>
    %cst_30 = arith.constant 1.000000e+00 : f32
    %43 = vector.broadcast %cst_30 : f32 to vector<1x128xf32>
    %44 = arith.addf %42, %43 : vector<1x128xf32>
    %c0_31 = arith.constant 0 : index
    %c0_32 = arith.constant 0 : index
    %45 = vector.load %arg12[%c0_31, %c0_32] : memref<1x128xf32, #tpu.memory_space<vmem>>, vector<1x128xf32>
    tpu.vector_store %arg12[%c0_31, %c0_32], %44 {strides = array<i32>} : memref<1x128xf32, #tpu.memory_space<vmem>>, vector<1x128xf32>,
    return
  }
  func.func @transform_0(%arg0: i32) -> (i32, i32) {
    %c0_i32 = arith.constant 0 : i32
    %c0_i32_0 = arith.constant 0 : i32
    return %c0_i32, %arg0 : i32, i32
  }
  func.func @transform_1(%arg0: i32) -> (i32, i32) {
    %c0_i32 = arith.constant 0 : i32
    %c0_i32_0 = arith.constant 0 : i32
    return %c0_i32, %arg0 : i32, i32
  }
  func.func @transform_2(%arg0: i32) -> (i32, i32) {
    %c0_i32 = arith.constant 0 : i32
    %c0_i32_0 = arith.constant 0 : i32
    %c0_i32_1 = arith.constant 0 : i32
    return %c0_i32, %c0_i32_0 : i32, i32
  }
  func.func @transform_3(%arg0: i32) -> (i32, i32) {
    %c0_i32 = arith.constant 0 : i32
    %c0_i32_0 = arith.constant 0 : i32
    %c0_i32_1 = arith.constant 0 : i32
    return %c0_i32, %c0_i32_0 : i32, i32
  }
  func.func @transform_4(%arg0: i32) -> (i32, i32) {
    %c0_i32 = arith.constant 0 : i32
    %c0_i32_0 = arith.constant 0 : i32
    %c0_i32_1 = arith.constant 0 : i32
    return %c0_i32, %c0_i32_0 : i32, i32
  }
  func.func @transform_5(%arg0: i32) -> (i32, i32) {
    %c0_i32 = arith.constant 0 : i32
    %c0_i32_0 = arith.constant 0 : i32
    %c0_i32_1 = arith.constant 0 : i32
    return %c0_i32, %c0_i32_0 : i32, i32
  }
  func.func @transform_6(%arg0: i32) -> (i32, i32) {
    %c0_i32 = arith.constant 0 : i32
    %c0_i32_0 = arith.constant 0 : i32
    %c0_i32_1 = arith.constant 0 : i32
    return %c0_i32, %c0_i32_0 : i32, i32
  }
  func.func @transform_7(%arg0: i32) -> (i32, i32) {
    %c0_i32 = arith.constant 0 : i32
    %c0_i32_0 = arith.constant 0 : i32
    %c0_i32_1 = arith.constant 0 : i32
    return %c0_i32, %c0_i32_0 : i32, i32
  }
  func.func @transform_8(%arg0: i32) -> (i32, i32) {
    %c0_i32 = arith.constant 0 : i32
    %c0_i32_0 = arith.constant 0 : i32
    %c0_i32_1 = arith.constant 0 : i32
    return %c0_i32, %c0_i32_0 : i32, i32
  }
  func.func @transform_9(%arg0: i32) -> (i32, i32) {
    %c0_i32 = arith.constant 0 : i32
    %c0_i32_0 = arith.constant 0 : i32
    %c0_i32_1 = arith.constant 0 : i32
    return %c0_i32, %c0_i32_0 : i32, i32
  }
  func.func @transform_10(%arg0: i32) -> (i32, i32) {
    %c0_i32 = arith.constant 0 : i32
    %c0_i32_0 = arith.constant 0 : i32
    %c0_i32_1 = arith.constant 0 : i32
    return %c0_i32, %c0_i32_0 : i32, i32
  }
  func.func @transform_11(%arg0: i32) -> (i32, i32) {
    %c0_i32 = arith.constant 0 : i32
    %c0_i32_0 = arith.constant 0 : i32
    return %c0_i32, %arg0 : i32, i32
  }
}

</mosaic_0001>

<llo_original>
// kernel: ncf_forward.1
$region0: #{ncf_forward.1}
  #allocation0 [shape = 'u32[]', space=smem, size = 0x4, offset = 0x4, fixed_abs, tag = 'smem constant byte address 0x4 - core index']
  #allocation1 [shape = 'u32[144,128]{1,0:T(1,128)}', space=vmem, size = 0x12000, scoped, tag = 'internal scratch']
  #allocation2 [shape = 'f32[1,1]{1,0:T(1,128)S(1)}', space=vmem, size = 0x200, scoped, tag = 'scoped memory for ncf_forward.1']
  %s0 = inlined_call_operand.vmem [shape: bf16[32,128], index: 0, kind: input, shape index: {}]
  %s1 = inlined_call_operand.vmem [shape: bf16[32,128], index: 1, kind: input, shape index: {}]
  %s2 = inlined_call_operand.vmem [shape: f32[32,32], index: 2, kind: input, shape index: {}]
  %s3 = inlined_call_operand.vmem [shape: f32[32,32], index: 3, kind: input, shape index: {}]
  %s4 = inlined_call_operand.vmem [shape: f32[32,1], index: 4, kind: input, shape index: {}]
  %s5 = inlined_call_operand.vmem [shape: f32[16,32], index: 5, kind: input, shape index: {}]
  %s6 = inlined_call_operand.vmem [shape: f32[16,1], index: 6, kind: input, shape index: {}]
  %s7 = inlined_call_operand.vmem [shape: f32[8,16], index: 7, kind: input, shape index: {}]
  %s8 = inlined_call_operand.vmem [shape: f32[8,1], index: 8, kind: input, shape index: {}]
  %s9 = inlined_call_operand.vmem [shape: f32[8,1], index: 9, kind: input, shape index: {}]
  %s10 = inlined_call_operand.<no memory space> [shape: f32[1,1], index: 10, kind: input, shape index: {}]
  %s11 = inlined_call_operand.vmem [shape: f32[1,128], index: 11, kind: output, shape index: {}]
  %s12 = sld [smem:[#allocation0]]
  $region54: #{ncf_forward.1} parent=0
    _
  %s14 = ssub.s32 1, %s12
  %s15 = scalar_select 0, %s14, %s12
  %v16 = vstv %s10
  %17 = vst [vmem:[#allocation2] sm:$0x1] %v16
  // Predicated region
  $region2: #{ncf_forward.1} parent=0 // pred_check
    _
  $region3: #{ncf_forward.1} parent=0 // pred_check_branch
    %19 = sbr.rel (0) target = $region5
  $region4: #{ncf_forward.1} parent=0 // pred_region
    _
  $region5: #{ncf_forward.1} parent=0 // pred_fallthru
    _
  // Predicated region
  $region6: #{ncf_forward.1} parent=0 // pred_check
    _
  $region7: #{ncf_forward.1} parent=0 // pred_check_branch
    %21 = sbr.rel (0) target = $region9
  $region8: #{ncf_forward.1} parent=0 // pred_region
    _
  $region9: #{ncf_forward.1} parent=0 // pred_fallthru
    _
  // Predicated region
  $region10: #{ncf_forward.1} parent=0 // pred_check
    _
  $region11: #{ncf_forward.1} parent=0 // pred_check_branch
    %23 = sbr.rel (0) target = $region13
  $region12: #{ncf_forward.1} parent=0 // pred_region
    _
  $region13: #{ncf_forward.1} parent=0 // pred_fallthru
    _
  // Predicated region
  $region14: #{ncf_forward.1} parent=0 // pred_check
    _
  $region15: #{ncf_forward.1} parent=0 // pred_check_branch
    %25 = sbr.rel (0) target = $region17
  $region16: #{ncf_forward.1} parent=0 // pred_region
    _
  $region17: #{ncf_forward.1} parent=0 // pred_fallthru
    _
  // Predicated region
  $region18: #{ncf_forward.1} parent=0 // pred_check
    _
  $region19: #{ncf_forward.1} parent=0 // pred_check_branch
    %27 = sbr.rel (0) target = $region21
  $region20: #{ncf_forward.1} parent=0 // pred_region
    _
  $region21: #{ncf_forward.1} parent=0 // pred_fallthru
    _
  // Predicated region
  $region22: #{ncf_forward.1} parent=0 // pred_check
    _
  $region23: #{ncf_forward.1} parent=0 // pred_check_branch
    %29 = sbr.rel (0) target = $region25
  $region24: #{ncf_forward.1} parent=0 // pred_region
    _
  $region25: #{ncf_forward.1} parent=0 // pred_fallthru
    _
  // Predicated region
  $region26: #{ncf_forward.1} parent=0 // pred_check
    _
  $region27: #{ncf_forward.1} parent=0 // pred_check_branch
    %31 = sbr.rel (0) target = $region29
  $region28: #{ncf_forward.1} parent=0 // pred_region
    _
  $region29: #{ncf_forward.1} parent=0 // pred_fallthru
    _
  // Predicated region
  $region30: #{ncf_forward.1} parent=0 // pred_check
    _
  $region31: #{ncf_forward.1} parent=0 // pred_check_branch
    %33 = sbr.rel (0) target = $region33
  $region32: #{ncf_forward.1} parent=0 // pred_region
    _
  $region33: #{ncf_forward.1} parent=0 // pred_fallthru
    _
  // Predicated region
  $region34: #{ncf_forward.1} parent=0 // pred_check
    _
  $region35: #{ncf_forward.1} parent=0 // pred_check_branch
    %35 = sbr.rel (0) target = $region37
  $region36: #{ncf_forward.1} parent=0 // pred_region
    _
  $region37: #{ncf_forward.1} parent=0 // pred_fallthru
    _
  // Predicated region
  $region38: #{ncf_forward.1} parent=0 // pred_check
    _
  $region39: #{ncf_forward.1} parent=0 // pred_check_branch
    %37 = sbr.rel (0) target = $region41
  $region40: #{ncf_forward.1} parent=0 // pred_region
    _
  $region41: #{ncf_forward.1} parent=0 // pred_fallthru
    _
  // Predicated region
  $region42: #{ncf_forward.1} parent=0 // pred_check
    _
  $region43: #{ncf_forward.1} parent=0 // pred_check_branch
    %39 = sbr.rel (0) target = $region45
  $region44: #{ncf_forward.1} parent=0 // pred_region
    _
  $region45: #{ncf_forward.1} parent=0 // pred_fallthru
    _
  %v40 = vld [vmem:[%s0] sm:$0xf]
  %v41 = vld [vmem:[%s0 + $0x4] sm:$0xf]
  %v42 = vld [vmem:[%s0 + $0x8] sm:$0xf]
  %v43 = vld [vmem:[%s0 + $0xc] sm:$0xf]
  %v44 = vunpack.c.l.bf16 %v40
  %v45 = vunpack.c.l.bf16 %v41
  %v46 = vunpack.c.l.bf16 %v42
  %v47 = vunpack.c.l.bf16 %v43
  %v48 = vld [vmem:[%s1] sm:$0xf]
  %v49 = vld [vmem:[%s1 + $0x4] sm:$0xf]
  %v50 = vld [vmem:[%s1 + $0x8] sm:$0xf]
  %v51 = vld [vmem:[%s1 + $0xc] sm:$0xf]
  %v52 = vunpack.c.l.bf16 %v48
  %v53 = vunpack.c.l.bf16 %v49
  %v54 = vunpack.c.l.bf16 %v50
  %v55 = vunpack.c.l.bf16 %v51
  %v56 = vld [vmem:[%s2] sm:$0xff]
  %v57 = vld [vmem:[%s2 + $0x8] sm:$0xff]
  %v58 = vld [vmem:[%s2 + $0x10] sm:$0xff]
  %v59 = vld [vmem:[%s2 + $0x18] sm:$0xff]
  %v60 = vld [vmem:[%s3] sm:$0xff]
  %v61 = vld [vmem:[%s3 + $0x8] sm:$0xff]
  %v62 = vld [vmem:[%s3 + $0x10] sm:$0xff]
  %v63 = vld [vmem:[%s3 + $0x18] sm:$0xff]
  %vm64 = vcmask 261120
  %v66 = vsel %vm64, %v60, 0
  %v69 = vsel %vm64, %v61, 0
  %v72 = vsel %vm64, %v62, 0
  %v75 = vsel %vm64, %v63, 0
  %77 = vmatprep.subr.mxu0 0.0
  %78 = vmatpush1.msra.mxu0 0.0
  %79 = vmatprep.subr.mxu0 0.0
  %80 = vmatpush1.msra.mxu0 0.0
  %81 = vmatprep.subr.mxu0 0.0
  %82 = vmatpush1.msra.mxu0 0.0
  %83 = vmatprep.subr.mxu0 0.0
  %84 = vmatpush1.msra.mxu0 0.0
  %85 = vmatprep.subr.mxu0 0.0
  %86 = vmatpush1.msra.mxu0 0.0
  %87 = vmatprep.subr.mxu0 0.0
  %88 = vmatpush1.msra.mxu0 0.0
  %89 = vmatprep.subr.mxu0 0.0
  %90 = vmatpush1.msra.mxu0 0.0
  %91 = vmatprep.subr.mxu0 0.0
  %92 = vmatpush1.msra.mxu0 0.0
  %93 = vmatprep.subr.mxu0 0.0
  %94 = vmatpush1.msra.mxu0 0.0
  %95 = vmatprep.subr.mxu0 0.0
  %96 = vmatpush1.msra.mxu0 0.0
  %97 = vmatprep.subr.mxu0 0.0
  %98 = vmatpush1.msra.mxu0 0.0
  %99 = vmatprep.subr.mxu0 0.0
  %100 = vmatpush1.msra.mxu0 0.0
  %101 = vmatprep.subr.mxu0 0.0
  %102 = vmatpush1.msra.mxu0 %v55
  %103 = vmatprep.subr.mxu0 0.0
  %104 = vmatpush1.msra.mxu0 %v54
  %105 = vmatprep.subr.mxu0 0.0
  %106 = vmatpush1.msra.mxu0 %v53
  %107 = vmatprep.subr.mxu0 0.0
  %108 = vmatpush1.msra.mxu0 %v52
  %109 = vmatprep.subr.mxu0 0.0
  %110 = vmatpush2.msra.mxu0 0.0
  %111 = vmatprep.subr.mxu0 0.0
  %112 = vmatpush2.msra.mxu0 0.0
  %113 = vmatprep.subr.mxu0 0.0
  %114 = vmatpush2.msra.mxu0 0.0
  %115 = vmatprep.subr.mxu0 0.0
  %116 = vmatpush2.msra.mxu0 0.0
  %117 = vmatprep.subr.mxu0 0.0
  %118 = vmatpush2.msra.mxu0 0.0
  %119 = vmatprep.subr.mxu0 0.0
  %120 = vmatpush2.msra.mxu0 0.0
  %121 = vmatprep.subr.mxu0 0.0
  %122 = vmatpush2.msra.mxu0 0.0
  %123 = vmatprep.subr.mxu0 0.0
  %124 = vmatpush2.msra.mxu0 0.0
  %125 = vmatprep.subr.mxu0 0.0
  %126 = vmatpush2.msra.mxu0 0.0
  %127 = vmatprep.subr.mxu0 0.0
  %128 = vmatpush2.msra.mxu0 0.0
  %129 = vmatprep.subr.mxu0 0.0
  %130 = vmatpush2.msra.mxu0 0.0
  %131 = vmatprep.subr.mxu0 0.0
  %132 = vmatpush2.msra.mxu0 0.0
  %133 = vmatprep.subr.mxu0 0.0
  %134 = vmatpush2.msra.mxu0 0.0
  %135 = vmatprep.subr.mxu0 0.0
  %136 = vmatpush2.msra.mxu0 0.0
  %137 = vmatprep.subr.mxu0 0.0
  %138 = vmatpush2.msra.mxu0 0.0
  %139 = vmatprep.subr.mxu0 0.0
  %140 = vmatpush2.msra.mxu0 0.0
  %141 = vmatprep.mubr.f32.mxu0 0.0
  %142 = vmatmul.mubr.f32.gmra.mxu0 %v66
  %v143 = vpop.f32.mrf.mxu0
  %v144 = vadd.f32 0.0, %v143
  %v145 = vpop.f32.mrf.mxu0
  %146 = vmatprep.mubr.f32.mxu0 0.0
  %147 = vmatmul.mubr.f32.gmra.mxu0 %v69
  %v148 = vpop.f32.mrf.mxu0
  %v149 = vadd.f32 0.0, %v148
  %v150 = vpop.f32.mrf.mxu0
  %151 = vmatprep.mubr.f32.mxu0 0.0
  %152 = vmatmul.mubr.f32.gmra.mxu0 %v72
  %v153 = vpop.f32.mrf.mxu0
  %v154 = vadd.f32 0.0, %v153
  %v155 = vpop.f32.mrf.mxu0
  %156 = vmatprep.mubr.f32.mxu0 0.0
  %157 = vmatmul.mubr.f32.gmra.mxu0 %v75
  %v158 = vpop.f32.mrf.mxu0
  %v159 = vadd.f32 0.0, %v158
  %v160 = vpop.f32.mrf.mxu0
  %161 = vdwg.mxu0
  %v163 = vsel %vm64, %v56, 0
  %v166 = vsel %vm64, %v57, 0
  %v169 = vsel %vm64, %v58, 0
  %v172 = vsel %vm64, %v59, 0
  %174 = vmatprep.subr.mxu0 0.0
  %175 = vmatpush1.msra.mxu0 0.0
  %176 = vmatprep.subr.mxu0 0.0
  %177 = vmatpush1.msra.mxu0 0.0
  %178 = vmatprep.subr.mxu0 0.0
  %179 = vmatpush1.msra.mxu0 0.0
  %180 = vmatprep.subr.mxu0 0.0
  %181 = vmatpush1.msra.mxu0 0.0
  %182 = vmatprep.subr.mxu0 0.0
  %183 = vmatpush1.msra.mxu0 0.0
  %184 = vmatprep.subr.mxu0 0.0
  %185 = vmatpush1.msra.mxu0 0.0
  %186 = vmatprep.subr.mxu0 0.0
  %187 = vmatpush1.msra.mxu0 0.0
  %188 = vmatprep.subr.mxu0 0.0
  %189 = vmatpush1.msra.mxu0 0.0
  %190 = vmatprep.subr.mxu0 0.0
  %191 = vmatpush1.msra.mxu0 0.0
  %192 = vmatprep.subr.mxu0 0.0
  %193 = vmatpush1.msra.mxu0 0.0
  %194 = vmatprep.subr.mxu0 0.0
  %195 = vmatpush1.msra.mxu0 0.0
  %196 = vmatprep.subr.mxu0 0.0
  %197 = vmatpush1.msra.mxu0 0.0
  %198 = vmatprep.subr.mxu0 0.0
  %199 = vmatpush1.msra.mxu0 %v47
  %200 = vmatprep.subr.mxu0 0.0
  %201 = vmatpush1.msra.mxu0 %v46
  %202 = vmatprep.subr.mxu0 0.0
  %203 = vmatpush1.msra.mxu0 %v45
  %204 = vmatprep.subr.mxu0 0.0
  %205 = vmatpush1.msra.mxu0 %v44
  %206 = vmatprep.subr.mxu0 0.0
  %207 = vmatpush2.msra.mxu0 0.0
  %208 = vmatprep.subr.mxu0 0.0
  %209 = vmatpush2.msra.mxu0 0.0
  %210 = vmatprep.subr.mxu0 0.0
  %211 = vmatpush2.msra.mxu0 0.0
  %212 = vmatprep.subr.mxu0 0.0
  %213 = vmatpush2.msra.mxu0 0.0
  %214 = vmatprep.subr.mxu0 0.0
  %215 = vmatpush2.msra.mxu0 0.0
  %216 = vmatprep.subr.mxu0 0.0
  %217 = vmatpush2.msra.mxu0 0.0
  %218 = vmatprep.subr.mxu0 0.0
  %219 = vmatpush2.msra.mxu0 0.0
  %220 = vmatprep.subr.mxu0 0.0
  %221 = vmatpush2.msra.mxu0 0.0
  %222 = vmatprep.subr.mxu0 0.0
  %223 = vmatpush2.msra.mxu0 0.0
  %224 = vmatprep.subr.mxu0 0.0
  %225 = vmatpush2.msra.mxu0 0.0
  %226 = vmatprep.subr.mxu0 0.0
  %227 = vmatpush2.msra.mxu0 0.0
  %228 = vmatprep.subr.mxu0 0.0
  %229 = vmatpush2.msra.mxu0 0.0
  %230 = vmatprep.subr.mxu0 0.0
  %231 = vmatpush2.msra.mxu0 0.0
  %232 = vmatprep.subr.mxu0 0.0
  %233 = vmatpush2.msra.mxu0 0.0
  %234 = vmatprep.subr.mxu0 0.0
  %235 = vmatpush2.msra.mxu0 0.0
  %236 = vmatprep.subr.mxu0 0.0
  %237 = vmatpush2.msra.mxu0 0.0
  %238 = vmatprep.mubr.f32.mxu0 0.0
  %239 = vmatmul.mubr.f32.gmra.mxu0 %v163
  %v240 = vpop.f32.mrf.mxu0
  %v241 = vadd.f32 %v144, %v240
  %v242 = vpop.f32.mrf.mxu0
  %243 = vmatprep.mubr.f32.mxu0 0.0
  %244 = vmatmul.mubr.f32.gmra.mxu0 %v166
  %v245 = vpop.f32.mrf.mxu0
  %v246 = vadd.f32 %v149, %v245
  %v247 = vpop.f32.mrf.mxu0
  %248 = vmatprep.mubr.f32.mxu0 0.0
  %249 = vmatmul.mubr.f32.gmra.mxu0 %v169
  %v250 = vpop.f32.mrf.mxu0
  %v251 = vadd.f32 %v154, %v250
  %v252 = vpop.f32.mrf.mxu0
  %253 = vmatprep.mubr.f32.mxu0 0.0
  %254 = vmatmul.mubr.f32.gmra.mxu0 %v172
  %v255 = vpop.f32.mrf.mxu0
  %v256 = vadd.f32 %v159, %v255
  %v257 = vpop.f32.mrf.mxu0
  %258 = vdwg.mxu0
  %v259 = vld [vmem:[%s4] sm:$0xff]
  %v260 = vld [vmem:[%s4 + $0x8] sm:$0xff]
  %v261 = vld [vmem:[%s4 + $0x10] sm:$0xff]
  %v262 = vld [vmem:[%s4 + $0x18] sm:$0xff]
  %264 = vset.pattern.permute.xlu0 0
  %265 = vperm.xlu0 %264, %v259
  %v266 = vpop.permute.xlu0 %265
  %269 = vset.pattern.permute.xlu0 0
  %270 = vperm.xlu0 %269, %v260
  %v271 = vpop.permute.xlu0 %270
  %274 = vset.pattern.permute.xlu0 0
  %275 = vperm.xlu0 %274, %v261
  %v276 = vpop.permute.xlu0 %275
  %279 = vset.pattern.permute.xlu0 0
  %280 = vperm.xlu0 %279, %v262
  %v281 = vpop.permute.xlu0 %280
  %v283 = vadd.f32 %v241, %v266
  %v284 = vadd.f32 %v246, %v271
  %v285 = vadd.f32 %v251, %v276
  %v286 = vadd.f32 %v256, %v281
  %v287 = vmax.f32 %v283, 0.0
  %v288 = vmax.f32 %v284, 0.0
  %v289 = vmax.f32 %v285, 0.0
  %v290 = vmax.f32 %v286, 0.0
  %v291 = vld [vmem:[%s5] sm:$0xff]
  %v292 = vld [vmem:[%s5 + $0x8] sm:$0xff]
  %v293 = vld [vmem:[%s6] sm:$0xff]
  %v294 = vld [vmem:[%s6 + $0x8] sm:$0xff]
  %296 = vset.pattern.permute.xlu0 0
  %297 = vperm.xlu0 %296, %v293
  %v298 = vpop.permute.xlu0 %297
  %301 = vset.pattern.permute.xlu0 0
  %302 = vperm.xlu0 %301, %v294
  %v303 = vpop.permute.xlu0 %302
  %v306 = vsel %vm64, %v291, 0
  %v309 = vsel %vm64, %v292, 0
  %311 = vmatprep.subr.mxu0 0.0
  %312 = vmatpush1.msra.mxu0 0.0
  %313 = vmatprep.subr.mxu0 0.0
  %314 = vmatpush1.msra.mxu0 0.0
  %315 = vmatprep.subr.mxu0 0.0
  %316 = vmatpush1.msra.mxu0 0.0
  %317 = vmatprep.subr.mxu0 0.0
  %318 = vmatpush1.msra.mxu0 0.0
  %319 = vmatprep.subr.mxu0 0.0
  %320 = vmatpush1.msra.mxu0 0.0
  %321 = vmatprep.subr.mxu0 0.0
  %322 = vmatpush1.msra.mxu0 0.0
  %323 = vmatprep.subr.mxu0 0.0
  %324 = vmatpush1.msra.mxu0 0.0
  %325 = vmatprep.subr.mxu0 0.0
  %326 = vmatpush1.msra.mxu0 0.0
  %327 = vmatprep.subr.mxu0 0.0
  %328 = vmatpush1.msra.mxu0 0.0
  %329 = vmatprep.subr.mxu0 0.0
  %330 = vmatpush1.msra.mxu0 0.0
  %331 = vmatprep.subr.mxu0 0.0
  %332 = vmatpush1.msra.mxu0 0.0
  %333 = vmatprep.subr.mxu0 0.0
  %334 = vmatpush1.msra.mxu0 0.0
  %335 = vmatprep.subr.mxu0 0.0
  %336 = vmatpush1.msra.mxu0 %v290
  %337 = vmatprep.subr.mxu0 0.0
  %338 = vmatpush1.msra.mxu0 %v289
  %339 = vmatprep.subr.mxu0 0.0
  %340 = vmatpush1.msra.mxu0 %v288
  %341 = vmatprep.subr.mxu0 0.0
  %342 = vmatpush1.msra.mxu0 %v287
  %343 = vmatprep.subr.mxu0 0.0
  %344 = vmatpush2.msra.mxu0 0.0
  %345 = vmatprep.subr.mxu0 0.0
  %346 = vmatpush2.msra.mxu0 0.0
  %347 = vmatprep.subr.mxu0 0.0
  %348 = vmatpush2.msra.mxu0 0.0
  %349 = vmatprep.subr.mxu0 0.0
  %350 = vmatpush2.msra.mxu0 0.0
  %351 = vmatprep.subr.mxu0 0.0
  %352 = vmatpush2.msra.mxu0 0.0
  %353 = vmatprep.subr.mxu0 0.0
  %354 = vmatpush2.msra.mxu0 0.0
  %355 = vmatprep.subr.mxu0 0.0
  %356 = vmatpush2.msra.mxu0 0.0
  %357 = vmatprep.subr.mxu0 0.0
  %358 = vmatpush2.msra.mxu0 0.0
  %359 = vmatprep.subr.mxu0 0.0
  %360 = vmatpush2.msra.mxu0 0.0
  %361 = vmatprep.subr.mxu0 0.0
  %362 = vmatpush2.msra.mxu0 0.0
  %363 = vmatprep.subr.mxu0 0.0
  %364 = vmatpush2.msra.mxu0 0.0
  %365 = vmatprep.subr.mxu0 0.0
  %366 = vmatpush2.msra.mxu0 0.0
  %367 = vmatprep.subr.mxu0 0.0
  %368 = vmatpush2.msra.mxu0 0.0
  %369 = vmatprep.subr.mxu0 0.0
  %370 = vmatpush2.msra.mxu0 0.0
  %371 = vmatprep.subr.mxu0 0.0
  %372 = vmatpush2.msra.mxu0 0.0
  %373 = vmatprep.subr.mxu0 0.0
  %374 = vmatpush2.msra.mxu0 0.0
  %375 = vmatprep.mubr.f32.mxu0 0.0
  %376 = vmatmul.mubr.f32.gmra.mxu0 %v306
  %v377 = vpop.f32.mrf.mxu0
  %v378 = vadd.f32 %v298, %v377
  %v379 = vpop.f32.mrf.mxu0
  %380 = vmatprep.mubr.f32.mxu0 0.0
  %381 = vmatmul.mubr.f32.gmra.mxu0 %v309
  %v382 = vpop.f32.mrf.mxu0
  %v383 = vadd.f32 %v303, %v382
  %v384 = vpop.f32.mrf.mxu0
  %385 = vdwg.mxu0
  %v386 = vmax.f32 %v378, 0.0
  %v387 = vmax.f32 %v383, 0.0
  %v388 = vld [vmem:[%s7] sm:$0xff]
  %v389 = vld [vmem:[%s8] sm:$0xff]
  %391 = vset.pattern.permute.xlu0 0
  %392 = vperm.xlu0 %391, %v389
  %v393 = vpop.permute.xlu0 %392
  %vm395 = vcmask 130048
  %v397 = vsel %vm395, %v388, 0
  %399 = vmatprep.subr.mxu0 0.0
  %400 = vmatpush1.msra.mxu0 0.0
  %401 = vmatprep.subr.mxu0 0.0
  %402 = vmatpush1.msra.mxu0 0.0
  %403 = vmatprep.subr.mxu0 0.0
  %404 = vmatpush1.msra.mxu0 0.0
  %405 = vmatprep.subr.mxu0 0.0
  %406 = vmatpush1.msra.mxu0 0.0
  %407 = vmatprep.subr.mxu0 0.0
  %408 = vmatpush1.msra.mxu0 0.0
  %409 = vmatprep.subr.mxu0 0.0
  %410 = vmatpush1.msra.mxu0 0.0
  %411 = vmatprep.subr.mxu0 0.0
  %412 = vmatpush1.msra.mxu0 0.0
  %413 = vmatprep.subr.mxu0 0.0
  %414 = vmatpush1.msra.mxu0 0.0
  %415 = vmatprep.subr.mxu0 0.0
  %416 = vmatpush1.msra.mxu0 0.0
  %417 = vmatprep.subr.mxu0 0.0
  %418 = vmatpush1.msra.mxu0 0.0
  %419 = vmatprep.subr.mxu0 0.0
  %420 = vmatpush1.msra.mxu0 0.0
  %421 = vmatprep.subr.mxu0 0.0
  %422 = vmatpush1.msra.mxu0 0.0
  %423 = vmatprep.subr.mxu0 0.0
  %424 = vmatpush1.msra.mxu0 0.0
  %425 = vmatprep.subr.mxu0 0.0
  %426 = vmatpush1.msra.mxu0 0.0
  %427 = vmatprep.subr.mxu0 0.0
  %428 = vmatpush1.msra.mxu0 %v387
  %429 = vmatprep.subr.mxu0 0.0
  %430 = vmatpush1.msra.mxu0 %v386
  %431 = vmatprep.subr.mxu0 0.0
  %432 = vmatpush2.msra.mxu0 0.0
  %433 = vmatprep.subr.mxu0 0.0
  %434 = vmatpush2.msra.mxu0 0.0
  %435 = vmatprep.subr.mxu0 0.0
  %436 = vmatpush2.msra.mxu0 0.0
  %437 = vmatprep.subr.mxu0 0.0
  %438 = vmatpush2.msra.mxu0 0.0
  %439 = vmatprep.subr.mxu0 0.0
  %440 = vmatpush2.msra.mxu0 0.0
  %441 = vmatprep.subr.mxu0 0.0
  %442 = vmatpush2.msra.mxu0 0.0
  %443 = vmatprep.subr.mxu0 0.0
  %444 = vmatpush2.msra.mxu0 0.0
  %445 = vmatprep.subr.mxu0 0.0
  %446 = vmatpush2.msra.mxu0 0.0
  %447 = vmatprep.subr.mxu0 0.0
  %448 = vmatpush2.msra.mxu0 0.0
  %449 = vmatprep.subr.mxu0 0.0
  %450 = vmatpush2.msra.mxu0 0.0
  %451 = vmatprep.subr.mxu0 0.0
  %452 = vmatpush2.msra.mxu0 0.0
  %453 = vmatprep.subr.mxu0 0.0
  %454 = vmatpush2.msra.mxu0 0.0
  %455 = vmatprep.subr.mxu0 0.0
  %456 = vmatpush2.msra.mxu0 0.0
  %457 = vmatprep.subr.mxu0 0.0
  %458 = vmatpush2.msra.mxu0 0.0
  %459 = vmatprep.subr.mxu0 0.0
  %460 = vmatpush2.msra.mxu0 0.0
  %461 = vmatprep.subr.mxu0 0.0
  %462 = vmatpush2.msra.mxu0 0.0
  %463 = vmatprep.mubr.f32.mxu0 0.0
  %464 = vmatmul.mubr.f32.gmra.mxu0 %v397
  %v465 = vpop.f32.mrf.mxu0
  %v466 = vadd.f32 %v393, %v465
  %v467 = vpop.f32.mrf.mxu0
  %468 = vdwg.mxu0
  %v469 = vmax.f32 %v466, 0.0
  %v470 = vld [vmem:[%s9] sm:$0xff]
  %472 = vset.pattern.permute.xlu0 0
  %473 = vperm.xlu0 %472, %v470
  %v474 = vpop.permute.xlu0 %473
  %v476 = vmul.f32 %v469, %v474
  %v477 = vrot.slane %v476, 4
  %v478 = vadd.f32 %v476, %v477
  %v479 = vrot.slane %v478, 2
  %v480 = vadd.f32 %v478, %v479
  %v481 = vrot.slane %v480, 1
  %v482 = vadd.f32 %v480, %v481
  %v483 = vld [vmem:[#allocation2] sm:$0x1]
  %485 = vset.pattern.permute.xlu0 0
  %486 = vperm.xlu0 %485, %v483
  %v487 = vpop.permute.xlu0 %486
  %v489 = vlaneseq
  %v490 = vshrl.u32 %v489, 7
  %v491 = vsub.s32 0, %v490
  %v492 = vrot.slane %v487, %v491
  %v493 = vadd.f32 %v482, %v492
  %v494 = vxor.u32 %v493, 2147483648
  %v495 = vmul.f32 %v494, 1.442695
  %v496 = vpow.pop %v495
  %v497 = vadd.f32 %v496, 1.0
  %v498 = vrcp.pop %v497
  %v499 = vmul.f32 1.0, %v498
  %v500 = vmul.f32 %v499, 5.0
  %v501 = vadd.f32 %v500, 1.0
  %502 = vst [vmem:[%s11] sm:$0x1] %v501
  // Predicated region
  $region46: #{ncf_forward.1} parent=0 // pred_check
    _
  $region47: #{ncf_forward.1} parent=0 // pred_check_branch
    %504 = sbr.rel (0) target = $region49
  $region48: #{ncf_forward.1} parent=0 // pred_region
    _
  $region49: #{ncf_forward.1} parent=0 // pred_fallthru
    _
  // Predicated region
  $region50: #{ncf_forward.1} parent=0 // pred_check
    _
  $region51: #{ncf_forward.1} parent=0 // pred_check_branch
    %506 = sbr.rel (0) target = $region53
  $region52: #{ncf_forward.1} parent=0 // pred_region
    _
  $region53: #{ncf_forward.1} parent=0 // pred_fallthru
    _

</llo_original>
